<compile_context>
chip_gen: v5e
topology: v5e:2x2
jax: 0.10.0
libtpu: 0.0.40
codegen_flags: <defaults>
</compile_context>

<pallas_src>
import functools
import numpy as np
import jax
import jax.numpy as jnp
from jax.experimental import pallas as pl
from jax.experimental.pallas import tpu as pltpu


# ------------------------------------------------------------------------ kernel
def _metahuman_kernel(coef_ref, A_ref, vt_ref, basis_ref, w_ref, out_ref, *, tv, B):
    """Per-vertex hot path: fused blendshapes + linear blend skinning.

    coef_ref  : (B, C)       expression coeffs ++ pose feature (C = E + 9), basis dtype
    A_ref     : (B, 24)      rows 0..11 of the two per-joint relative rigid transforms
    vt_ref    : (1, 3*TV)    template vertices, packed per tile as [x | y | z]
    basis_ref : (C, 3*TV)    fused expression+pose basis, packed per tile as [x | y | z]
    w_ref     : (2, TV)      LBS weights tile (root, jaw)
    out_ref   : (3*B, TV)    skinned vertices tile, rows grouped [x(B) | y(B) | z(B)]
    """
    coef = coef_ref[...]                                   # (B, C)
    # One dot for all three coordinate planes; f32 accumulation on the MXU.
    posed = jnp.dot(coef, basis_ref[...],
                    preferred_element_type=jnp.float32) + vt_ref[...]      # (B, 3*TV)

    x = posed[:, 0:tv]                                     # tv-aligned lane slices
    y = posed[:, tv:2 * tv]
    z = posed[:, 2 * tv:3 * tv]

    w = w_ref[...]                                         # (2, TV)
    w0 = w[0:1, :]
    w1 = w[1:2, :]
    A = A_ref[...]                                         # (B, 24) = [root rows | jaw rows]

    def trow(r):
        # Row r of the per-vertex skinning matrix T = w0*A_root + w1*A_jaw -> (B, TV)
        return A[:, r:r + 1] * w0 + A[:, 12 + r:13 + r] * w1

    xo = trow(0) * x + trow(1) * y + trow(2) * z + trow(3)
    yo = trow(4) * x + trow(5) * y + trow(6) * z + trow(7)
    zo = trow(8) * x + trow(9) * y + trow(10) * z + trow(11)

    # Single dense full-block store (alternative: 3 static sub-block stores; either is
    # negligible vs. the basis DMA).
    out_ref[...] = jnp.concatenate([xo, yo, zo], axis=0)


def skin_pallas(coeffs, A24, vt_pack, basis_pack, w_pad, tv=1024):
    """coeffs:(B,C), A24:(B,24), vt_pack:(1,3*Vp), basis_pack:(C,3*Vp), w_pad:(2,Vp)."""
    B, C = coeffs.shape
    Vp = w_pad.shape[1]
    assert tv % 128 == 0 and Vp % tv == 0, "pad V to a multiple of the (128-aligned) tile"
    grid = (Vp // tv,)
    coeffs = coeffs.astype(basis_pack.dtype)               # bf16 x bf16 -> f32 acc
    kernel = functools.partial(_metahuman_kernel, tv=tv, B=B)
    return pl.pallas_call(
        kernel,
        out_shape=jax.ShapeDtypeStruct((3 * B, Vp), jnp.float32),
        grid_spec=pltpu.PrefetchScalarGridSpec(
            num_scalar_prefetch=0,
            grid=grid,
            in_specs=[
                pl.BlockSpec((B, C), lambda i: (0, 0)),
                pl.BlockSpec((B, 24), lambda i: (0, 0)),
                pl.BlockSpec((1, 3 * tv), lambda i: (0, i)),
                pl.BlockSpec((C, 3 * tv), lambda i: (0, i)),
                pl.BlockSpec((2, tv), lambda i: (0, i)),
            ],
            out_specs=pl.BlockSpec((3 * B, tv), lambda i: (0, i)),
        ),
        compiler_params=pltpu.CompilerParams(
            dimension_semantics=("parallel",)),
    )(coeffs, A24, vt_pack, basis_pack, w_pad)


def skin_ref(coeffs, A24, vt_pack, basis_pack, w_pad, tv=1024):
    """Pure-JAX reference for the kernel math (same packed layout, same output layout)."""
    B, C = coeffs.shape
    Vp = w_pad.shape[1]
    nt = Vp // tv
    # Unpack the per-tile [x|y|z] layout back to planar (3, C, Vp) / (3, Vp).
    basis_r = basis_pack.reshape(C, nt, 3, tv).transpose(2, 0, 1, 3).reshape(3, C, Vp)
    vt_r = vt_pack.reshape(nt, 3, tv).transpose(1, 0, 2).reshape(3, Vp)
    cf = coeffs.astype(basis_pack.dtype).astype(jnp.float32)        # mimic kernel rounding
    bas = basis_r.astype(jnp.float32)
    v_posed = jnp.einsum('bc,xcv->xbv', cf, bas) + vt_r[:, None, :]  # (3, B, Vp)
    T = jnp.einsum('bjr,jv->brv', A24.reshape(B, 2, 12), w_pad)      # (B, 12, Vp)
    x, y, z = v_posed[0], v_posed[1], v_posed[2]
    xo = T[:, 0] * x + T[:, 1] * y + T[:, 2] * z + T[:, 3]
    yo = T[:, 4] * x + T[:, 5] * y + T[:, 6] * z + T[:, 7]
    zo = T[:, 8] * x + T[:, 9] * y + T[:, 10] * z + T[:, 11]
    return jnp.concatenate([xo, yo, zo], axis=0)                     # (3*B, Vp)


# -------------------------------------------------------------------------- glue
def batch_rodrigues(rot_vecs, eps=1e-8):
    """Axis-angle (B, 3) -> rotation matrices (B, 3, 3).  Mirrors smplx batch_rodrigues."""
    angle = jnp.linalg.norm(rot_vecs + eps, axis=1, keepdims=True)       # (B, 1)
    rot_dir = rot_vecs / angle
    cos = jnp.cos(angle)[:, :, None]
    sin = jnp.sin(angle)[:, :, None]
    rx, ry, rz = rot_dir[:, 0], rot_dir[:, 1], rot_dir[:, 2]
    zeros = jnp.zeros_like(rx)
    K = jnp.stack([zeros, -rz, ry, rz, zeros, -rx, -ry, rx, zeros],
                  axis=1).reshape(-1, 3, 3)
    ident = jnp.eye(3, dtype=rot_vecs.dtype)[None]
    return ident + sin * K + (1.0 - cos) * jnp.matmul(K, K)


def prepare_model(v_template_r, expdirs_r, posedirs_r, w_r, tv=1024,
                  basis_dtype=jnp.bfloat16):
    """Fuse the expression+pose bases into one packed (C, 3*Vp) basis (per-tile [x|y|z]),
    pad the vertex axis to a multiple of the tile size, and cast the basis (default bf16:
    it dominates HBM traffic on every TPU generation; set float32 if accuracy demands)."""
    V = v_template_r.shape[1]
    C = expdirs_r.shape[0] + posedirs_r.shape[0]
    basis = jnp.concatenate([jnp.transpose(expdirs_r, (1, 0, 2)),
                             jnp.transpose(posedirs_r, (1, 0, 2))], axis=1)   # (3, C, V) f32
    Vp = ((V + tv - 1) // tv) * tv
    pad = Vp - V
    if pad:
        basis = jnp.pad(basis, ((0, 0), (0, 0), (0, pad)))
        v_template_r = jnp.pad(v_template_r, ((0, 0), (0, pad)))
        w_r = jnp.pad(w_r, ((0, 0), (0, pad)))                                # zero weights
    nt = Vp // tv
    basis_pack = (basis.reshape(3, C, nt, tv).transpose(1, 2, 0, 3)
                       .reshape(C, 3 * Vp).astype(basis_dtype))               # (C, 3*Vp)
    vt_pack = (v_template_r.reshape(3, nt, tv).transpose(1, 0, 2)
                           .reshape(1, 3 * Vp).astype(jnp.float32))           # (1, 3*Vp)
    return dict(basis_pack=basis_pack, vt_pack=vt_pack, w_pad=w_r, V=V, tv=tv)


def metahuman_forward(params, model, skin_fn):
    """params: (B, P).  Columns 7, 8, 9 drive the jaw; the rest are expressions."""
    B = params.shape[0]
    dtype = jnp.float32
    jpb = model['jaw_pose_basis']                                        # (3, 3)

    jaw_pose9 = batch_rodrigues(jpb[0][None, :] * params[:, 9:10])
    jaw_pose8 = batch_rodrigues(jpb[1][None, :] * params[:, 8:9])
    jaw_pose7 = batch_rodrigues(jpb[2][None, :] * params[:, 7:8])
    jaw = jnp.matmul(jnp.matmul(jaw_pose9, jaw_pose8), jaw_pose7)        # (B, 3, 3)

    ident = jnp.eye(3, dtype=dtype)
    pose_feature = (jaw - ident[None]).reshape(B, 9)                     # pose2rot=False path
    # Fused coefficient vector: [exp_coeffs ; pose_feature]  (matches basis column order)
    coeffs = jnp.concatenate([params[:, :7], params[:, 10:], pose_feature], axis=1)

    rot_mats = jnp.stack([jnp.broadcast_to(ident, (B, 3, 3)), jaw], axis=1)  # (B, 2, 3, 3)

    # batch_rigid_transform for a 2-joint chain: parents = [-1, 0] (root -> jaw).
    joints = jnp.concatenate(
        [jnp.zeros((1, 3), dtype), model['J_coordinate']], axis=0)       # (2, 3)
    joints_b = jnp.broadcast_to(joints[None], (B, 2, 3))
    rel = joints_b.at[:, 1].add(-joints_b[:, 0])

    def make_T(R, t):
        top = jnp.concatenate([R, t[:, :, None]], axis=2)                # (B, 3, 4)
        bot = jnp.broadcast_to(jnp.array([[[0., 0., 0., 1.]]], dtype), (B, 1, 4))
        return jnp.concatenate([top, bot], axis=1)                       # (B, 4, 4)

    T0 = make_T(rot_mats[:, 0], rel[:, 0])
    T1 = jnp.matmul(T0, make_T(rot_mats[:, 1], rel[:, 1]))
    transforms = jnp.stack([T0, T1], axis=1)                             # (B, 2, 4, 4)

    jh = jnp.concatenate([joints_b, jnp.zeros((B, 2, 1), dtype)], axis=-1)   # (B, 2, 4)
    tj = jnp.einsum('bjrc,bjc->bjr', transforms, jh)                     # (B, 2, 4)
    A = transforms.at[..., 3].add(-tj)                                   # relative transforms
    A24 = A.reshape(B, 2, 16)[:, :, :12].reshape(B, 24)   # rows 12..15 are (0,0,0,1): unused

    tv = model['tv']
    out = skin_fn(coeffs, A24, model['vt_pack'], model['basis_pack'],
                  model['w_pad'], tv)                                    # (3*B, Vp)
    Vp = model['w_pad'].shape[1]
    out_planar = out.reshape(3, B, Vp)[:, :, :model['V']]                # (3, B, V)

    # TODO(synk): landmark gather (dynamic index select over V) done in plain JAX on the
    # planar tensor; only the tiny (B, L, 3) result is transposed.
    landmarks = jnp.transpose(out_planar[:, :, model['lmks_idx']], (1, 2, 0))  # (B, L, 3)
    # (B, V, 3) transpose kept only for the module's output contract; consumers that accept
    # the planar (3, B, V) layout should take out_planar directly and skip this.
    vertices = jnp.transpose(out_planar, (1, 2, 0))                      # (B, V, 3)
    return vertices, landmarks


# -------------------------------------------------------------------------- main
if __name__ == "__main__":
    B, V, E, TV = 2, 2048, 16, 512   # grid = Vp/TV = 4: 2 pipelined steps per v7x TensorCore
    P = E + 3                        # params = 7 exp + 3 jaw + (E - 7) exp
    L = 8

    key = jax.random.PRNGKey(0)
    ks = jax.random.split(key, 8)
    v_template_r = jax.random.normal(ks[0], (3, V), jnp.float32) * 0.1
    expdirs_r = jax.random.normal(ks[1], (E, 3, V), jnp.float32) * 0.01
    posedirs_r = jax.random.normal(ks[2], (9, 3, V), jnp.float32) * 0.01
    w_r = jax.nn.softmax(jax.random.normal(ks[5], (2, V), jnp.float32), axis=0)

    common = dict(
        jaw_pose_basis=jax.random.normal(ks[3], (3, 3), jnp.float32),
        J_coordinate=jax.random.normal(ks[4], (1, 3), jnp.float32) * 0.05,
        lmks_idx=jnp.array([0, 5, 17, 33, 64, 100, 150, 200], dtype=jnp.int32),
    )
    model = prepare_model(v_template_r, expdirs_r, posedirs_r, w_r, tv=TV,
                          basis_dtype=jnp.bfloat16)
    model.update(common)
    params = jax.random.normal(ks[6], (B, P), jnp.float32) * 0.3

    vertices, landmarks = metahuman_forward(params, model, skin_pallas)
    jax.block_until_ready((vertices, landmarks))

    # Kernel vs. pure-JAX reference with the same (bf16) packed basis.
    v_ref, l_ref = metahuman_forward(params, model, skin_ref)
    assert vertices.shape == (B, V, 3) and landmarks.shape == (B, L, 3)
    assert np.allclose(np.asarray(vertices), np.asarray(v_ref), atol=1e-4)
    assert np.allclose(np.asarray(landmarks), np.asarray(l_ref), atol=1e-4)

    # Sanity check that the bf16 basis stays close to the full-f32 path.
    model_f32 = prepare_model(v_template_r, expdirs_r, posedirs_r, w_r, tv=TV,
                              basis_dtype=jnp.float32)
    model_f32.update(common)
    v_f32, _ = metahuman_forward(params, model_f32, skin_ref)
    assert np.allclose(np.asarray(vertices), np.asarray(v_f32), atol=1e-2)

    print("KERNEL_OK")
</pallas_src>

<mosaic_0001>
module attributes {stable_mosaic.version = 11 : i64} {
  func.func @_metahuman_kernel(%arg0: i32, %arg1: memref<2x25xbf16, #tpu.memory_space<vmem>>, %arg2: memref<2x24xf32, #tpu.memory_space<vmem>>, %arg3: memref<1x1536xf32, #tpu.memory_space<vmem>>, %arg4: memref<25x1536xbf16, #tpu.memory_space<vmem>>, %arg5: memref<2x512xf32, #tpu.memory_space<vmem>>, %arg6: memref<6x512xf32, #tpu.memory_space<vmem>>) attributes {dimension_semantics = [#tpu.dimension_semantics<parallel>], iteration_bounds = array<i64: 4>, scalar_prefetch = 0 : i64, scratch_operands = 0 : i64, tpu.core_type = #tpu.core_type<tc>, window_params = [{pipeline_mode = #tpu.pipeline_mode<synchronous>, transform_indices = @transform_0, window_bounds = array<i64: 2, 25>}, {pipeline_mode = #tpu.pipeline_mode<synchronous>, transform_indices = @transform_1, window_bounds = array<i64: 2, 24>}, {transform_indices = @transform_2, window_bounds = array<i64: 1, 1536>}, {transform_indices = @transform_3, window_bounds = array<i64: 25, 1536>}, {transform_indices = @transform_4, window_bounds = array<i64: 2, 512>}, {transform_indices = @transform_5, window_bounds = array<i64: 6, 512>}]} {
    %c0 = arith.constant 0 : index
    %c0_0 = arith.constant 0 : index
    %0 = vector.load %arg1[%c0, %c0_0] : memref<2x25xbf16, #tpu.memory_space<vmem>>, vector<2x25xbf16>
    %c0_1 = arith.constant 0 : index
    %c0_2 = arith.constant 0 : index
    %1 = vector.load %arg4[%c0_1, %c0_2] : memref<25x1536xbf16, #tpu.memory_space<vmem>>, vector<25x1536xbf16>
    %cst = arith.constant dense<0.000000e+00> : vector<2x1536xf32>
    %2 = tpu.matmul %0, %1, %cst {dimension_numbers = #tpu.dot_dimension_numbers<[1], [0], [0], [1], [0, 0, 1, 1], [], []>} : vector<2x25xbf16>, vector<25x1536xbf16>, vector<2x1536xf32> -> vector<2x1536xf32>
    %c0_3 = arith.constant 0 : index
    %c0_4 = arith.constant 0 : index
    %3 = vector.load %arg3[%c0_3, %c0_4] : memref<1x1536xf32, #tpu.memory_space<vmem>>, vector<1x1536xf32>
    %4 = vector.broadcast %3 : vector<1x1536xf32> to vector<2x1536xf32>
    %5 = arith.addf %2, %4 : vector<2x1536xf32>
    %6 = vector.extract_strided_slice %5 {offsets = [0, 0], sizes = [2, 512], strides = [1, 1]} : vector<2x1536xf32> to vector<2x512xf32>
    %7 = vector.extract_strided_slice %5 {offsets = [0, 512], sizes = [2, 512], strides = [1, 1]} : vector<2x1536xf32> to vector<2x512xf32>
    %8 = vector.extract_strided_slice %5 {offsets = [0, 1024], sizes = [2, 512], strides = [1, 1]} : vector<2x1536xf32> to vector<2x512xf32>
    %c0_5 = arith.constant 0 : index
    %c0_6 = arith.constant 0 : index
    %9 = vector.load %arg5[%c0_5, %c0_6] : memref<2x512xf32, #tpu.memory_space<vmem>>, vector<2x512xf32>
    %10 = vector.extract_strided_slice %9 {offsets = [0, 0], sizes = [1, 512], strides = [1, 1]} : vector<2x512xf32> to vector<1x512xf32>
    %11 = vector.extract_strided_slice %9 {offsets = [1, 0], sizes = [1, 512], strides = [1, 1]} : vector<2x512xf32> to vector<1x512xf32>
    %c0_7 = arith.constant 0 : index
    %c0_8 = arith.constant 0 : index
    %12 = vector.load %arg2[%c0_7, %c0_8] : memref<2x24xf32, #tpu.memory_space<vmem>>, vector<2x24xf32>
    %13 = vector.extract_strided_slice %12 {offsets = [0, 0], sizes = [2, 1], strides = [1, 1]} : vector<2x24xf32> to vector<2x1xf32>
    %14 = vector.broadcast %13 : vector<2x1xf32> to vector<2x512xf32>
    %15 = vector.broadcast %10 : vector<1x512xf32> to vector<2x512xf32>
    %16 = arith.mulf %14, %15 : vector<2x512xf32>
    %17 = vector.extract_strided_slice %12 {offsets = [0, 12], sizes = [2, 1], strides = [1, 1]} : vector<2x24xf32> to vector<2x1xf32>
    %18 = vector.broadcast %17 : vector<2x1xf32> to vector<2x512xf32>
    %19 = vector.broadcast %11 : vector<1x512xf32> to vector<2x512xf32>
    %20 = arith.mulf %18, %19 : vector<2x512xf32>
    %21 = arith.addf %16, %20 : vector<2x512xf32>
    %22 = arith.mulf %21, %6 : vector<2x512xf32>
    %23 = vector.extract_strided_slice %12 {offsets = [0, 1], sizes = [2, 1], strides = [1, 1]} : vector<2x24xf32> to vector<2x1xf32>
    %24 = vector.broadcast %23 : vector<2x1xf32> to vector<2x512xf32>
    %25 = vector.broadcast %10 : vector<1x512xf32> to vector<2x512xf32>
    %26 = arith.mulf %24, %25 : vector<2x512xf32>
    %27 = vector.extract_strided_slice %12 {offsets = [0, 13], sizes = [2, 1], strides = [1, 1]} : vector<2x24xf32> to vector<2x1xf32>
    %28 = vector.broadcast %27 : vector<2x1xf32> to vector<2x512xf32>
    %29 = vector.broadcast %11 : vector<1x512xf32> to vector<2x512xf32>
    %30 = arith.mulf %28, %29 : vector<2x512xf32>
    %31 = arith.addf %26, %30 : vector<2x512xf32>
    %32 = arith.mulf %31, %7 : vector<2x512xf32>
    %33 = arith.addf %22, %32 : vector<2x512xf32>
    %34 = vector.extract_strided_slice %12 {offsets = [0, 2], sizes = [2, 1], strides = [1, 1]} : vector<2x24xf32> to vector<2x1xf32>
    %35 = vector.broadcast %34 : vector<2x1xf32> to vector<2x512xf32>
    %36 = vector.broadcast %10 : vector<1x512xf32> to vector<2x512xf32>
    %37 = arith.mulf %35, %36 : vector<2x512xf32>
    %38 = vector.extract_strided_slice %12 {offsets = [0, 14], sizes = [2, 1], strides = [1, 1]} : vector<2x24xf32> to vector<2x1xf32>
    %39 = vector.broadcast %38 : vector<2x1xf32> to vector<2x512xf32>
    %40 = vector.broadcast %11 : vector<1x512xf32> to vector<2x512xf32>
    %41 = arith.mulf %39, %40 : vector<2x512xf32>
    %42 = arith.addf %37, %41 : vector<2x512xf32>
    %43 = arith.mulf %42, %8 : vector<2x512xf32>
    %44 = arith.addf %33, %43 : vector<2x512xf32>
    %45 = vector.extract_strided_slice %12 {offsets = [0, 3], sizes = [2, 1], strides = [1, 1]} : vector<2x24xf32> to vector<2x1xf32>
    %46 = vector.broadcast %45 : vector<2x1xf32> to vector<2x512xf32>
    %47 = vector.broadcast %10 : vector<1x512xf32> to vector<2x512xf32>
    %48 = arith.mulf %46, %47 : vector<2x512xf32>
    %49 = vector.extract_strided_slice %12 {offsets = [0, 15], sizes = [2, 1], strides = [1, 1]} : vector<2x24xf32> to vector<2x1xf32>
    %50 = vector.broadcast %49 : vector<2x1xf32> to vector<2x512xf32>
    %51 = vector.broadcast %11 : vector<1x512xf32> to vector<2x512xf32>
    %52 = arith.mulf %50, %51 : vector<2x512xf32>
    %53 = arith.addf %48, %52 : vector<2x512xf32>
    %54 = arith.addf %44, %53 : vector<2x512xf32>
    %55 = vector.extract_strided_slice %12 {offsets = [0, 4], sizes = [2, 1], strides = [1, 1]} : vector<2x24xf32> to vector<2x1xf32>
    %56 = vector.broadcast %55 : vector<2x1xf32> to vector<2x512xf32>
    %57 = vector.broadcast %10 : vector<1x512xf32> to vector<2x512xf32>
    %58 = arith.mulf %56, %57 : vector<2x512xf32>
    %59 = vector.extract_strided_slice %12 {offsets = [0, 16], sizes = [2, 1], strides = [1, 1]} : vector<2x24xf32> to vector<2x1xf32>
    %60 = vector.broadcast %59 : vector<2x1xf32> to vector<2x512xf32>
    %61 = vector.broadcast %11 : vector<1x512xf32> to vector<2x512xf32>
    %62 = arith.mulf %60, %61 : vector<2x512xf32>
    %63 = arith.addf %58, %62 : vector<2x512xf32>
    %64 = arith.mulf %63, %6 : vector<2x512xf32>
    %65 = vector.extract_strided_slice %12 {offsets = [0, 5], sizes = [2, 1], strides = [1, 1]} : vector<2x24xf32> to vector<2x1xf32>
    %66 = vector.broadcast %65 : vector<2x1xf32> to vector<2x512xf32>
    %67 = vector.broadcast %10 : vector<1x512xf32> to vector<2x512xf32>
    %68 = arith.mulf %66, %67 : vector<2x512xf32>
    %69 = vector.extract_strided_slice %12 {offsets = [0, 17], sizes = [2, 1], strides = [1, 1]} : vector<2x24xf32> to vector<2x1xf32>
    %70 = vector.broadcast %69 : vector<2x1xf32> to vector<2x512xf32>
    %71 = vector.broadcast %11 : vector<1x512xf32> to vector<2x512xf32>
    %72 = arith.mulf %70, %71 : vector<2x512xf32>
    %73 = arith.addf %68, %72 : vector<2x512xf32>
    %74 = arith.mulf %73, %7 : vector<2x512xf32>
    %75 = arith.addf %64, %74 : vector<2x512xf32>
    %76 = vector.extract_strided_slice %12 {offsets = [0, 6], sizes = [2, 1], strides = [1, 1]} : vector<2x24xf32> to vector<2x1xf32>
    %77 = vector.broadcast %76 : vector<2x1xf32> to vector<2x512xf32>
    %78 = vector.broadcast %10 : vector<1x512xf32> to vector<2x512xf32>
    %79 = arith.mulf %77, %78 : vector<2x512xf32>
    %80 = vector.extract_strided_slice %12 {offsets = [0, 18], sizes = [2, 1], strides = [1, 1]} : vector<2x24xf32> to vector<2x1xf32>
    %81 = vector.broadcast %80 : vector<2x1xf32> to vector<2x512xf32>
    %82 = vector.broadcast %11 : vector<1x512xf32> to vector<2x512xf32>
    %83 = arith.mulf %81, %82 : vector<2x512xf32>
    %84 = arith.addf %79, %83 : vector<2x512xf32>
    %85 = arith.mulf %84, %8 : vector<2x512xf32>
    %86 = arith.addf %75, %85 : vector<2x512xf32>
    %87 = vector.extract_strided_slice %12 {offsets = [0, 7], sizes = [2, 1], strides = [1, 1]} : vector<2x24xf32> to vector<2x1xf32>
    %88 = vector.broadcast %87 : vector<2x1xf32> to vector<2x512xf32>
    %89 = vector.broadcast %10 : vector<1x512xf32> to vector<2x512xf32>
    %90 = arith.mulf %88, %89 : vector<2x512xf32>
    %91 = vector.extract_strided_slice %12 {offsets = [0, 19], sizes = [2, 1], strides = [1, 1]} : vector<2x24xf32> to vector<2x1xf32>
    %92 = vector.broadcast %91 : vector<2x1xf32> to vector<2x512xf32>
    %93 = vector.broadcast %11 : vector<1x512xf32> to vector<2x512xf32>
    %94 = arith.mulf %92, %93 : vector<2x512xf32>
    %95 = arith.addf %90, %94 : vector<2x512xf32>
    %96 = arith.addf %86, %95 : vector<2x512xf32>
    %97 = vector.extract_strided_slice %12 {offsets = [0, 8], sizes = [2, 1], strides = [1, 1]} : vector<2x24xf32> to vector<2x1xf32>
    %98 = vector.broadcast %97 : vector<2x1xf32> to vector<2x512xf32>
    %99 = vector.broadcast %10 : vector<1x512xf32> to vector<2x512xf32>
    %100 = arith.mulf %98, %99 : vector<2x512xf32>
    %101 = vector.extract_strided_slice %12 {offsets = [0, 20], sizes = [2, 1], strides = [1, 1]} : vector<2x24xf32> to vector<2x1xf32>
    %102 = vector.broadcast %101 : vector<2x1xf32> to vector<2x512xf32>
    %103 = vector.broadcast %11 : vector<1x512xf32> to vector<2x512xf32>
    %104 = arith.mulf %102, %103 : vector<2x512xf32>
    %105 = arith.addf %100, %104 : vector<2x512xf32>
    %106 = arith.mulf %105, %6 : vector<2x512xf32>
    %107 = vector.extract_strided_slice %12 {offsets = [0, 9], sizes = [2, 1], strides = [1, 1]} : vector<2x24xf32> to vector<2x1xf32>
    %108 = vector.broadcast %107 : vector<2x1xf32> to vector<2x512xf32>
    %109 = vector.broadcast %10 : vector<1x512xf32> to vector<2x512xf32>
    %110 = arith.mulf %108, %109 : vector<2x512xf32>
    %111 = vector.extract_strided_slice %12 {offsets = [0, 21], sizes = [2, 1], strides = [1, 1]} : vector<2x24xf32> to vector<2x1xf32>
    %112 = vector.broadcast %111 : vector<2x1xf32> to vector<2x512xf32>
    %113 = vector.broadcast %11 : vector<1x512xf32> to vector<2x512xf32>
    %114 = arith.mulf %112, %113 : vector<2x512xf32>
    %115 = arith.addf %110, %114 : vector<2x512xf32>
    %116 = arith.mulf %115, %7 : vector<2x512xf32>
    %117 = arith.addf %106, %116 : vector<2x512xf32>
    %118 = vector.extract_strided_slice %12 {offsets = [0, 10], sizes = [2, 1], strides = [1, 1]} : vector<2x24xf32> to vector<2x1xf32>
    %119 = vector.broadcast %118 : vector<2x1xf32> to vector<2x512xf32>
    %120 = vector.broadcast %10 : vector<1x512xf32> to vector<2x512xf32>
    %121 = arith.mulf %119, %120 : vector<2x512xf32>
    %122 = vector.extract_strided_slice %12 {offsets = [0, 22], sizes = [2, 1], strides = [1, 1]} : vector<2x24xf32> to vector<2x1xf32>
    %123 = vector.broadcast %122 : vector<2x1xf32> to vector<2x512xf32>
    %124 = vector.broadcast %11 : vector<1x512xf32> to vector<2x512xf32>
    %125 = arith.mulf %123, %124 : vector<2x512xf32>
    %126 = arith.addf %121, %125 : vector<2x512xf32>
    %127 = arith.mulf %126, %8 : vector<2x512xf32>
    %128 = arith.addf %117, %127 : vector<2x512xf32>
    %129 = vector.extract_strided_slice %12 {offsets = [0, 11], sizes = [2, 1], strides = [1, 1]} : vector<2x24xf32> to vector<2x1xf32>
    %130 = vector.broadcast %129 : vector<2x1xf32> to vector<2x512xf32>
    %131 = vector.broadcast %10 : vector<1x512xf32> to vector<2x512xf32>
    %132 = arith.mulf %130, %131 : vector<2x512xf32>
    %133 = vector.extract_strided_slice %12 {offsets = [0, 23], sizes = [2, 1], strides = [1, 1]} : vector<2x24xf32> to vector<2x1xf32>
    %134 = vector.broadcast %133 : vector<2x1xf32> to vector<2x512xf32>
    %135 = vector.broadcast %11 : vector<1x512xf32> to vector<2x512xf32>
    %136 = arith.mulf %134, %135 : vector<2x512xf32>
    %137 = arith.addf %132, %136 : vector<2x512xf32>
    %138 = arith.addf %128, %137 : vector<2x512xf32>
    %139 = tpu.concatenate %54, %96, %138 in 0 : vector<2x512xf32>, vector<2x512xf32>, vector<2x512xf32> -> vector<6x512xf32>
    %c0_9 = arith.constant 0 : index
    %c0_10 = arith.constant 0 : index
    %140 = vector.load %arg6[%c0_9, %c0_10] : memref<6x512xf32, #tpu.memory_space<vmem>>, vector<6x512xf32>
    tpu.vector_store %arg6[%c0_9, %c0_10], %139 {strides = array<i32>} : memref<6x512xf32, #tpu.memory_space<vmem>>, vector<6x512xf32>,
    return
  }
  func.func @transform_0(%arg0: i32) -> (i32, i32) {
    %c0_i32 = arith.constant 0 : i32
    %c0_i32_0 = arith.constant 0 : i32
    %c0_i32_1 = arith.constant 0 : i32
    return %c0_i32, %c0_i32_0 : i32, i32
  }
  func.func @transform_1(%arg0: i32) -> (i32, i32) {
    %c0_i32 = arith.constant 0 : i32
    %c0_i32_0 = arith.constant 0 : i32
    %c0_i32_1 = arith.constant 0 : i32
    return %c0_i32, %c0_i32_0 : i32, i32
  }
  func.func @transform_2(%arg0: i32) -> (i32, i32) {
    %c0_i32 = arith.constant 0 : i32
    %c0_i32_0 = arith.constant 0 : i32
    return %c0_i32, %arg0 : i32, i32
  }
  func.func @transform_3(%arg0: i32) -> (i32, i32) {
    %c0_i32 = arith.constant 0 : i32
    %c0_i32_0 = arith.constant 0 : i32
    return %c0_i32, %arg0 : i32, i32
  }
  func.func @transform_4(%arg0: i32) -> (i32, i32) {
    %c0_i32 = arith.constant 0 : i32
    %c0_i32_0 = arith.constant 0 : i32
    return %c0_i32, %arg0 : i32, i32
  }
  func.func @transform_5(%arg0: i32) -> (i32, i32) {
    %c0_i32 = arith.constant 0 : i32
    %c0_i32_0 = arith.constant 0 : i32
    return %c0_i32, %arg0 : i32, i32
  }
}

</mosaic_0001>

<llo_original>
// kernel: tpu_custom_call.1
$region0: #{tpu_custom_call.1}
  #allocation0 [shape = 'u32[]', space=smem, size = 0x4, offset = 0x4, fixed_abs, tag = 'smem constant byte address 0x4 - core index']
  #allocation1 [shape = 'u32[72,128]{1,0:T(1,128)}', space=vmem, size = 0x9000, scoped, tag = 'internal scratch']
  %s0 = inlined_call_operand.hbm [shape: bf16[2,25], index: 0, kind: input, shape index: {}]
  %s1 = inlined_call_operand.hbm [shape: f32[2,24], index: 1, kind: input, shape index: {}]
  %s2 = inlined_call_operand.hbm [shape: f32[1,6144], index: 2, kind: input, shape index: {}]
  %s3 = inlined_call_operand.hbm [shape: bf16[25,6144], index: 3, kind: input, shape index: {}]
  %s4 = inlined_call_operand.hbm [shape: f32[2,2048], index: 4, kind: input, shape index: {}]
  %s5 = inlined_call_operand.hbm [shape: f32[6,2048], index: 5, kind: output, shape index: {}]
  %s6 = sld [smem:[#allocation0]]
  $region73: #{tpu_custom_call.1} parent=0
    _
  %s8 = ssub.s32 1, %s6
  %s9 = scalar_select 0, %s8, %s6
  $region1: #{tpu_custom_call.1} parent=0
    #allocation2 [shape = 'u8[512]{0}', space=vmem, size = 0x400, scoped, tag = 'input window, operand 0, single buffered']
    #allocation3 [shape = 's32[2]{0}', space=sflag, size = 0x8, scoped, tag = 'scoped memory for tpu_custom_call.1']
    #allocation4 [shape = 's32[2]{0}', space=sflag, size = 0x8, scoped, tag = 'scoped memory for tpu_custom_call.1']
    #allocation5 [shape = 'u8[1024]{0}', space=vmem, size = 0x400, scoped, tag = 'input window, operand 1, single buffered']
    #allocation6 [shape = 's32[1]{0}', space=sflag, size = 0x4, scoped, tag = 'scoped memory for tpu_custom_call.1']
    #allocation7 [shape = 'u8[12288]{0}', space=vmem, size = 0x3000, scoped, tag = 'input window, operand 2']
    #allocation8 [shape = 'u8[196608]{0}', space=vmem, size = 0x30000, scoped, tag = 'input window, operand 3']
    #allocation9 [shape = 'u8[8192]{0}', space=vmem, size = 0x2000, scoped, tag = 'input window, operand 4']
    #allocation10 [shape = 'u8[32768]{0}', space=vmem, size = 0x8000, scoped, tag = 'output window, operand 0']
    %10 = vsyncpa [#allocation3], 0
    %11 = vsyncpa [#allocation6], 0
    %12 = vsyncpa [#allocation4], 0
    %s13 = scalar_lea.sflag [#allocation4], 1
    %14 = vsyncpa %s13, 0
    loop: start=0, step=1, limit=6
    $region2: #{tpu_custom_call.1} parent=1 // loop_pre_header
      _
    $region3: #{tpu_custom_call.1} parent=1 // loop_header
      %s16 = sphi 0, %s20
      %p17 = scmp.ge.s32.totalorder %s16, 6
      %s24 = sphi 0, %s24
      %s26 = sphi 0, %s24
      %s27 = sphi 0, %s26
      %s41 = sphi 0, %s27
      %s45 = sphi 0, %s45
      %s47 = sphi 0, %s45
      %s48 = sphi 0, %s47
      %s62 = sphi 0, %s48
      %s68 = sphi 0, %s70
      %s71 = sphi 0, %s68
      %s72 = sphi 0, %s71
      %s88 = sphi 0, %s72
      %s94 = sphi 0, %s96
      %s97 = sphi 0, %s94
      %s98 = sphi 0, %s97
      %s114 = sphi 0, %s98
      %s120 = sphi 0, %s122
      %s123 = sphi 0, %s120
      %s124 = sphi 0, %s123
      %s140 = sphi 0, %s124
      %s146 = sphi 0, %s148
      %s149 = sphi 0, %s146
      %s150 = sphi 0, %s149
      %s166 = sphi 0, %s150
    $region4: #{tpu_custom_call.1} parent=1 // loop_header_branch
      %19 = sbr.rel (%p17) target = $region8
    $region5: #{tpu_custom_call.1} parent=1 // loop_body
      %s21 = ssub.s32 %s16, 1
      %s22 = ssub.s32 %s16, 2
      %s23 = sadd.s32 %s16, 1
      %s25 = sadd.s32 %s24, 1
      %p28 = scmp.eq.s32.totalorder %s16, 3
      %p29 = scmp.ne.s32.totalorder %s24, %s26
      %p30 = scmp.eq.s32.totalorder %s16, 0
      %p31 = por %p29, %p30
      %p32 = scmp.ne.s32.totalorder %s24, %s26
      %p33 = scmp.eq.s32.totalorder %s21, 3
      %p34 = por %p32, %p33
      %p35 = scmp.ne.s32.totalorder %s26, %s27
      %p36 = scmp.eq.s32.totalorder %s21, 0
      %p37 = por %p35, %p36
      %p38 = scmp.ne.s32.totalorder %s26, %s27
      %p39 = scmp.eq.s32.totalorder %s22, 3
      %p40 = por %p38, %p39
      %p42 = scmp.ne.s32.totalorder %s27, %s41
      %p43 = scmp.eq.s32.totalorder %s22, 0
      %p44 = por %p42, %p43
      %s46 = sadd.s32 %s45, 1
      %p49 = scmp.eq.s32.totalorder %s16, 3
      %p50 = scmp.ne.s32.totalorder %s45, %s47
      %p51 = scmp.eq.s32.totalorder %s16, 0
      %p52 = por %p50, %p51
      %p53 = scmp.ne.s32.totalorder %s45, %s47
      %p54 = scmp.eq.s32.totalorder %s21, 3
      %p55 = por %p53, %p54
      %p56 = scmp.ne.s32.totalorder %s47, %s48
      %p57 = scmp.eq.s32.totalorder %s21, 0
      %p58 = por %p56, %p57
      %p59 = scmp.ne.s32.totalorder %s47, %s48
      %p60 = scmp.eq.s32.totalorder %s22, 3
      %p61 = por %p59, %p60
      %p63 = scmp.ne.s32.totalorder %s48, %s62
      %p64 = scmp.eq.s32.totalorder %s22, 0
      %p65 = por %p63, %p64
      %s66 = ssub.s32 %s16, %s23
      %p67 = scmp.eq.s32.totalorder %s66, 0
      %s69 = sadd.s32 %s68, 1
      %s70 = scalar_select %p67, %s68, %s69
      %p73 = pneg %p67
      %p74 = scmp.eq.s32.totalorder %s16, 3
      %p75 = por %p73, %p74
      %p76 = scmp.ne.s32.totalorder %s68, %s71
      %p77 = scmp.eq.s32.totalorder %s16, 0
      %p78 = por %p76, %p77
      %p79 = scmp.ne.s32.totalorder %s68, %s71
      %p80 = scmp.eq.s32.totalorder %s21, 3
      %p81 = por %p79, %p80
      %p82 = scmp.ne.s32.totalorder %s71, %s72
      %p83 = scmp.eq.s32.totalorder %s21, 0
      %p84 = por %p82, %p83
      %p85 = scmp.ne.s32.totalorder %s71, %s72
      %p86 = scmp.eq.s32.totalorder %s22, 3
      %p87 = por %p85, %p86
      %p89 = scmp.ne.s32.totalorder %s72, %s88
      %p90 = scmp.eq.s32.totalorder %s22, 0
      %p91 = por %p89, %p90
      %s92 = ssub.s32 %s16, %s23
      %p93 = scmp.eq.s32.totalorder %s92, 0
      %s95 = sadd.s32 %s94, 1
      %s96 = scalar_select %p93, %s94, %s95
      %p99 = pneg %p93
      %p100 = scmp.eq.s32.totalorder %s16, 3
      %p101 = por %p99, %p100
      %p102 = scmp.ne.s32.totalorder %s94, %s97
      %p103 = scmp.eq.s32.totalorder %s16, 0
      %p104 = por %p102, %p103
      %p105 = scmp.ne.s32.totalorder %s94, %s97
      %p106 = scmp.eq.s32.totalorder %s21, 3
      %p107 = por %p105, %p106
      %p108 = scmp.ne.s32.totalorder %s97, %s98
      %p109 = scmp.eq.s32.totalorder %s21, 0
      %p110 = por %p108, %p109
      %p111 = scmp.ne.s32.totalorder %s97, %s98
      %p112 = scmp.eq.s32.totalorder %s22, 3
      %p113 = por %p111, %p112
      %p115 = scmp.ne.s32.totalorder %s98, %s114
      %p116 = scmp.eq.s32.totalorder %s22, 0
      %p117 = por %p115, %p116
      %s118 = ssub.s32 %s16, %s23
      %p119 = scmp.eq.s32.totalorder %s118, 0
      %s121 = sadd.s32 %s120, 1
      %s122 = scalar_select %p119, %s120, %s121
      %p125 = pneg %p119
      %p126 = scmp.eq.s32.totalorder %s16, 3
      %p127 = por %p125, %p126
      %p128 = scmp.ne.s32.totalorder %s120, %s123
      %p129 = scmp.eq.s32.totalorder %s16, 0
      %p130 = por %p128, %p129
      %p131 = scmp.ne.s32.totalorder %s120, %s123
      %p132 = scmp.eq.s32.totalorder %s21, 3
      %p133 = por %p131, %p132
      %p134 = scmp.ne.s32.totalorder %s123, %s124
      %p135 = scmp.eq.s32.totalorder %s21, 0
      %p136 = por %p134, %p135
      %p137 = scmp.ne.s32.totalorder %s123, %s124
      %p138 = scmp.eq.s32.totalorder %s22, 3
      %p139 = por %p137, %p138
      %p141 = scmp.ne.s32.totalorder %s124, %s140
      %p142 = scmp.eq.s32.totalorder %s22, 0
      %p143 = por %p141, %p142
      %s144 = ssub.s32 %s16, %s23
      %p145 = scmp.eq.s32.totalorder %s144, 0
      %s147 = sadd.s32 %s146, 1
      %s148 = scalar_select %p145, %s146, %s147
      %p151 = pneg %p145
      %p152 = scmp.eq.s32.totalorder %s16, 3
      %p153 = por %p151, %p152
      %p154 = scmp.ne.s32.totalorder %s146, %s149
      %p155 = scmp.eq.s32.totalorder %s16, 0
      %p156 = por %p154, %p155
      %p157 = scmp.ne.s32.totalorder %s146, %s149
      %p158 = scmp.eq.s32.totalorder %s21, 3
      %p159 = por %p157, %p158
      %p160 = scmp.ne.s32.totalorder %s149, %s150
      %p161 = scmp.eq.s32.totalorder %s21, 0
      %p162 = por %p160, %p161
      %p163 = scmp.ne.s32.totalorder %s149, %s150
      %p164 = scmp.eq.s32.totalorder %s22, 3
      %p165 = por %p163, %p164
      %p167 = scmp.ne.s32.totalorder %s150, %s166
      %p168 = scmp.eq.s32.totalorder %s22, 0
      %p169 = por %p167, %p168
      %p170 = scmp.le.s32.totalorder 1, %s16
      %p171 = scmp.lt.s32.totalorder %s16, 5
      %p172 = pnand %p170, %p171
      %p173 = pneg %p172
      // Predicated region
      $region9: #{tpu_custom_call.1} parent=5 // pred_check
        _
      $region10: #{tpu_custom_call.1} parent=5 // pred_check_branch
        %175 = sbr.rel (%p172) target = $region12
      $region11: #{tpu_custom_call.1} parent=5 // pred_region
        %s176 = ssub.s32 %s16, 1
        // Predicated region
        $region13: #{tpu_custom_call.1} parent=11 // pred_check
          %p177 = pneg %p37
        $region14: #{tpu_custom_call.1} parent=11 // pred_check_branch
          %179 = sbr.rel (%p177) target = $region16
        $region15: #{tpu_custom_call.1} parent=11 // pred_region
          %181 = vsyncadd [#allocation3], 0
          %s183 = sshll.u32 %s0, 4
          %s184 = int_to_ptr.hbm [resolvable:$true] %s183
          %s185 = sshll.u32 [#allocation2], 4
          %s186 = int_to_ptr.vmem [resolvable:$true] %s185
          %188 = dma.hbm_to_vmem [thread:$0]  %s184, 16, %s186, [#allocation3]
        $region16: #{tpu_custom_call.1} parent=11 // pred_fallthru
          _
        // Predicated region
        $region17: #{tpu_custom_call.1} parent=11 // pred_check
          %p189 = pneg %p58
        $region18: #{tpu_custom_call.1} parent=11 // pred_check_branch
          %191 = sbr.rel (%p189) target = $region20
        $region19: #{tpu_custom_call.1} parent=11 // pred_region
          %193 = vsyncadd [#allocation6], 0
          %s195 = sshll.u32 %s1, 4
          %s196 = int_to_ptr.hbm [resolvable:$true] %s195
          %s197 = sshll.u32 [#allocation5], 4
          %s198 = int_to_ptr.vmem [resolvable:$true] %s197
          %200 = dma.hbm_to_vmem [thread:$0]  %s196, 32, %s198, [#allocation6]
        $region20: #{tpu_custom_call.1} parent=11 // pred_fallthru
          _
      $region12: #{tpu_custom_call.1} parent=5 // pred_fallthru
        _
      %p201 = scmp.lt.s32.totalorder %s16, 4
      // Predicated region
      $region21: #{tpu_custom_call.1} parent=5 // pred_check
        %p202 = pneg %p201
      $region22: #{tpu_custom_call.1} parent=5 // pred_check_branch
        %204 = sbr.rel (%p202) target = $region24
      $region23: #{tpu_custom_call.1} parent=5 // pred_region
        // Predicated region
        $region25: #{tpu_custom_call.1} parent=23 // pred_check
          %p205 = pneg %p78
        $region26: #{tpu_custom_call.1} parent=23 // pred_check_branch
          %207 = sbr.rel (%p205) target = $region28
        $region27: #{tpu_custom_call.1} parent=23 // pred_region
          %s208 = sand.u32 %s16, 1
          %s209 = scalar_lea.sflag [#allocation3], %s208
          %s210 = sand.u32 %s68, 1
          %s211 = smul.addr %s210, 12
          %s212 = scalar_lea.vmem [#allocation7], %s211
          %s213 = smul.u32 12, %s16
          %215 = vsyncadd %s209, 0
          %s216 = scalar_lea.hbm %s2, %s213
          %s218 = sshll.u32 %s216, 4
          %s219 = int_to_ptr.hbm [resolvable:$true] %s218
          %s220 = sshll.u32 %s212, 4
          %s221 = int_to_ptr.vmem [resolvable:$true] %s220
          %223 = dma.hbm_to_vmem [thread:$0]  %s219, 192, %s221, %s209
        $region28: #{tpu_custom_call.1} parent=23 // pred_fallthru
          _
        // Predicated region
        $region29: #{tpu_custom_call.1} parent=23 // pred_check
          %p224 = pneg %p104
        $region30: #{tpu_custom_call.1} parent=23 // pred_check_branch
          %226 = sbr.rel (%p224) target = $region32
        $region31: #{tpu_custom_call.1} parent=23 // pred_region
          %s227 = sand.u32 %s16, 1
          %s228 = scalar_lea.sflag [#allocation3], %s227
          %s229 = sand.u32 %s94, 1
          %s230 = smul.addr %s229, 192
          %s231 = scalar_lea.vmem [#allocation8], %s230
          %s232 = smul.u32 12, %s16
          %234 = vsyncadd %s228, 0
          %s235 = smul.addr %s232, 4
          %s236 = scalar_lea.hbm %s3, %s235
          %s237 = sshll.u32 %s236, 4
          %s238 = int_to_ptr.hbm [resolvable:$true] %s237
          %s239 = sshll.u32 %s231, 4
          %s240 = int_to_ptr.vmem [resolvable:$true] %s239
          %245 = dma.hbm_to_vmem [thread:$0]  %s238, 3072, %s240, %s228, 3072, 768, 48
        $region32: #{tpu_custom_call.1} parent=23 // pred_fallthru
          _
        // Predicated region
        $region33: #{tpu_custom_call.1} parent=23 // pred_check
          %p246 = pneg %p130
        $region34: #{tpu_custom_call.1} parent=23 // pred_check_branch
          %248 = sbr.rel (%p246) target = $region36
        $region35: #{tpu_custom_call.1} parent=23 // pred_region
          %s249 = sand.u32 %s16, 1
          %s250 = scalar_lea.sflag [#allocation3], %s249
          %s251 = sand.u32 %s120, 1
          %s252 = smul.addr %s251, 8
          %s253 = scalar_lea.vmem [#allocation9], %s252
          %s254 = smul.u32 4, %s16
          %256 = vsyncadd %s250, 0
          %s257 = smul.addr %s254, 2
          %s258 = scalar_lea.hbm %s4, %s257
          %s260 = sshll.u32 %s258, 4
          %s261 = int_to_ptr.hbm [resolvable:$true] %s260
          %s262 = sshll.u32 %s253, 4
          %s263 = int_to_ptr.vmem [resolvable:$true] %s262
          %265 = dma.hbm_to_vmem [thread:$0]  %s261, 128, %s263, %s250
        $region36: #{tpu_custom_call.1} parent=23 // pred_fallthru
          _
      $region24: #{tpu_custom_call.1} parent=5 // pred_fallthru
        _
      %p266 = scmp.le.s32.totalorder 1, %s16
      %p267 = scmp.lt.s32.totalorder %s16, 5
      %p268 = pnand %p266, %p267
      %p269 = pneg %p268
      // Predicated region
      $region37: #{tpu_custom_call.1} parent=5 // pred_check
        _
      $region38: #{tpu_custom_call.1} parent=5 // pred_check_branch
        %271 = sbr.rel (%p268) target = $region40
      $region39: #{tpu_custom_call.1} parent=5 // pred_region
        %s272 = ssub.s32 %s16, 1
        // Predicated region
        $region41: #{tpu_custom_call.1} parent=39 // pred_check
          %p273 = pneg %p37
        $region42: #{tpu_custom_call.1} parent=39 // pred_check_branch
          %275 = sbr.rel (%p273) target = $region44
        $region43: #{tpu_custom_call.1} parent=39 // pred_region
          %277 = dma.done [#allocation3], 16
        $region44: #{tpu_custom_call.1} parent=39 // pred_fallthru
          _
        // Predicated region
        $region45: #{tpu_custom_call.1} parent=39 // pred_check
          %p278 = pneg %p58
        $region46: #{tpu_custom_call.1} parent=39 // pred_check_branch
          %280 = sbr.rel (%p278) target = $region48
        $region47: #{tpu_custom_call.1} parent=39 // pred_region
          %282 = dma.done [#allocation6], 32
        $region48: #{tpu_custom_call.1} parent=39 // pred_fallthru
          _
        %s283 = sand.u32 %s21, 1
        %s284 = scalar_lea.sflag [#allocation3], %s283
        %s285 = sand.u32 %s71, 1
        %s286 = smul.addr %s285, 12
        %s287 = scalar_lea.vmem [#allocation7], %s286
        // Predicated region
        $region49: #{tpu_custom_call.1} parent=39 // pred_check
          %p288 = pneg %p84
        $region50: #{tpu_custom_call.1} parent=39 // pred_check_branch
          %290 = sbr.rel (%p288) target = $region52
        $region51: #{tpu_custom_call.1} parent=39 // pred_region
          %292 = dma.done %s284, 192
        $region52: #{tpu_custom_call.1} parent=39 // pred_fallthru
          _
        %s293 = sand.u32 %s21, 1
        %s294 = scalar_lea.sflag [#allocation3], %s293
        %s295 = sand.u32 %s97, 1
        %s296 = smul.addr %s295, 192
        %s297 = scalar_lea.vmem [#allocation8], %s296
        // Predicated region
        $region53: #{tpu_custom_call.1} parent=39 // pred_check
          %p298 = pneg %p110
        $region54: #{tpu_custom_call.1} parent=39 // pred_check_branch
          %300 = sbr.rel (%p298) target = $region56
        $region55: #{tpu_custom_call.1} parent=39 // pred_region
          %302 = dma.done %s294, 3072
        $region56: #{tpu_custom_call.1} parent=39 // pred_fallthru
          _
        %s303 = sand.u32 %s21, 1
        %s304 = scalar_lea.sflag [#allocation3], %s303
        %s305 = sand.u32 %s123, 1
        %s306 = smul.addr %s305, 8
        %s307 = scalar_lea.vmem [#allocation9], %s306
        // Predicated region
        $region57: #{tpu_custom_call.1} parent=39 // pred_check
          %p308 = pneg %p136
        $region58: #{tpu_custom_call.1} parent=39 // pred_check_branch
          %310 = sbr.rel (%p308) target = $region60
        $region59: #{tpu_custom_call.1} parent=39 // pred_region
          %312 = dma.done %s304, 128
        $region60: #{tpu_custom_call.1} parent=39 // pred_fallthru
          _
        %p313 = pneg %p37
        %p314 = pneg %p34
        %p315 = pneg %p58
        %p316 = pneg %p55
        %s317 = sand.u32 %s21, 1
        %s318 = scalar_lea.sflag [#allocation3], %s317
        %s319 = sand.u32 %s71, 1
        %s320 = smul.addr %s319, 12
        %s321 = scalar_lea.vmem [#allocation7], %s320
        %p322 = pneg %p84
        %p323 = pneg %p81
        %s324 = sand.u32 %s21, 1
        %s325 = scalar_lea.sflag [#allocation3], %s324
        %s326 = sand.u32 %s97, 1
        %s327 = smul.addr %s326, 192
        %s328 = scalar_lea.vmem [#allocation8], %s327
        %p329 = pneg %p110
        %p330 = pneg %p107
        %s331 = sand.u32 %s21, 1
        %s332 = scalar_lea.sflag [#allocation3], %s331
        %s333 = sand.u32 %s123, 1
        %s334 = smul.addr %s333, 8
        %s335 = scalar_lea.vmem [#allocation9], %s334
        %p336 = pneg %p136
        %p337 = pneg %p133
        %p338 = pneg %p162
        %p339 = pneg %p159
        %s340 = sand.u32 %s149, 1
        %s341 = scalar_lea.sflag [#allocation4], %s340
        %s342 = sand.u32 %s149, 1
        %s343 = smul.addr %s342, 32
        %s344 = scalar_lea.vmem [#allocation10], %s343
        %s345 = smul.u32 12, %s21
        %s346 = smul.u32 12, %s21
        %s347 = smul.u32 4, %s21
        %s348 = smul.u32 4, %s21
        %v350 = vld [vmem:[#allocation2] sm:$0x1]
        %v351 = vld [vmem:[%s297] sm:$0xff]
        %v352 = vld [vmem:[%s297 + $0x8] sm:$0xff]
        %v353 = vld [vmem:[%s297 + $0x10] sm:$0xff]
        %v354 = vld [vmem:[%s297 + $0x18] sm:$0xff]
        %v355 = vld [vmem:[%s297 + $0x20] sm:$0xff]
        %v356 = vld [vmem:[%s297 + $0x28] sm:$0xff]
        %v357 = vld [vmem:[%s297 + $0x30] sm:$0xff]
        %v358 = vld [vmem:[%s297 + $0x38] sm:$0xff]
        %v359 = vld [vmem:[%s297 + $0x40] sm:$0xff]
        %v360 = vld [vmem:[%s297 + $0x48] sm:$0xff]
        %v361 = vld [vmem:[%s297 + $0x50] sm:$0xff]
        %v362 = vld [vmem:[%s297 + $0x58] sm:$0xff]
        %v363 = vld [vmem:[%s297 + $0x60] sm:$0xff]
        %v364 = vld [vmem:[%s297 + $0x68] sm:$0xff]
        %v365 = vld [vmem:[%s297 + $0x70] sm:$0xff]
        %v366 = vld [vmem:[%s297 + $0x78] sm:$0xff]
        %v367 = vld [vmem:[%s297 + $0x80] sm:$0xff]
        %v368 = vld [vmem:[%s297 + $0x88] sm:$0xff]
        %v369 = vld [vmem:[%s297 + $0x90] sm:$0x11]
        %v370 = vld [vmem:[%s297 + $0x98] sm:$0x11]
        %v371 = vld [vmem:[%s297 + $0xa0] sm:$0x11]
        %v372 = vld [vmem:[%s297 + $0xa8] sm:$0x11]
        %v373 = vld [vmem:[%s297 + $0xb0] sm:$0x11]
        %v374 = vld [vmem:[%s297 + $0xb8] sm:$0x11]
        %v375 = vld [vmem:[%s287] sm:$0xff]
        %v376 = vld [vmem:[%s287 + $0x8] sm:$0xf]
        %v379 = vperm.slane %v375, 0
        %v380 = vperm.slane %v375, 1
        %v381 = vperm.slane %v375, 2
        %v382 = vperm.slane %v375, 3
        %v383 = vperm.slane %v375, 4
        %v384 = vperm.slane %v375, 5
        %v385 = vperm.slane %v375, 6
        %v386 = vperm.slane %v375, 7
        %v387 = vperm.slane %v376, 0
        %v388 = vperm.slane %v376, 1
        %v389 = vperm.slane %v376, 2
        %v390 = vperm.slane %v376, 3
        %v427 = vunpack.c.l.b16 %v351
        %v428 = vunpack.c.h.b16 %v351
        %v429 = vunpack.c.l.b16 %v352
        %v430 = vunpack.c.h.b16 %v352
        %v431 = vunpack.c.l.b16 %v353
        %v432 = vunpack.c.h.b16 %v353
        %v433 = vunpack.c.l.b16 %v354
        %v434 = vunpack.c.h.b16 %v354
        %v435 = vunpack.c.l.b16 %v355
        %v436 = vunpack.c.h.b16 %v355
        %v437 = vunpack.c.l.b16 %v356
        %v438 = vunpack.c.h.b16 %v356
        %v439 = vunpack.c.l.b16 %v357
        %v440 = vunpack.c.h.b16 %v357
        %v441 = vunpack.c.l.b16 %v358
        %v442 = vunpack.c.h.b16 %v358
        %v443 = vunpack.c.l.b16 %v359
        %v444 = vunpack.c.h.b16 %v359
        %v445 = vunpack.c.l.b16 %v360
        %v446 = vunpack.c.h.b16 %v360
        %v447 = vunpack.c.l.b16 %v361
        %v448 = vunpack.c.h.b16 %v361
        %v449 = vunpack.c.l.b16 %v362
        %v450 = vunpack.c.h.b16 %v362
        %v451 = vunpack.c.l.b16 %v363
        %v452 = vunpack.c.h.b16 %v363
        %v453 = vunpack.c.l.b16 %v364
        %v454 = vunpack.c.h.b16 %v364
        %v455 = vunpack.c.l.b16 %v365
        %v456 = vunpack.c.h.b16 %v365
        %v457 = vunpack.c.l.b16 %v366
        %v458 = vunpack.c.h.b16 %v366
        %v459 = vunpack.c.l.b16 %v367
        %v460 = vunpack.c.h.b16 %v367
        %v461 = vunpack.c.l.b16 %v368
        %v462 = vunpack.c.h.b16 %v368
        %v463 = vunpack.c.l.b16 %v369
        %v464 = vunpack.c.h.b16 %v369
        %v465 = vunpack.c.l.b16 %v370
        %v466 = vunpack.c.h.b16 %v370
        %v467 = vunpack.c.l.b16 %v371
        %v468 = vunpack.c.h.b16 %v371
        %v469 = vunpack.c.l.b16 %v372
        %v470 = vunpack.c.h.b16 %v372
        %v471 = vunpack.c.l.b16 %v373
        %v472 = vunpack.c.h.b16 %v373
        %v473 = vunpack.c.l.b16 %v374
        %v474 = vunpack.c.h.b16 %v374
        %v475 = vpack.c.b16 %v439, %v427
        %v476 = vpack.c.b16 %v440, %v428
        %v477 = vpack.c.b16 %v441, %v429
        %v478 = vpack.c.b16 %v442, %v430
        %v479 = vpack.c.b16 %v443, %v431
        %v480 = vpack.c.b16 %v444, %v432
        %v481 = vpack.c.b16 %v445, %v433
        %v482 = vpack.c.b16 %v446, %v434
        %v483 = vpack.c.b16 %v447, %v435
        %v484 = vpack.c.b16 %v448, %v436
        %v485 = vpack.c.b16 %v449, %v437
        %v486 = vpack.c.b16 %v450, %v438
        %v487 = vpack.c.b16 %v463, %v451
        %v488 = vpack.c.b16 %v464, %v452
        %v489 = vpack.c.b16 %v465, %v453
        %v490 = vpack.c.b16 %v466, %v454
        %v491 = vpack.c.b16 %v467, %v455
        %v492 = vpack.c.b16 %v468, %v456
        %v493 = vpack.c.b16 %v469, %v457
        %v494 = vpack.c.b16 %v470, %v458
        %v495 = vpack.c.b16 %v471, %v459
        %v496 = vpack.c.b16 %v472, %v460
        %v497 = vpack.c.b16 %v473, %v461
        %v498 = vpack.c.b16 %v474, %v462
        %vm511 = vcmask 203776
        %v513 = vsel %vm511, %v350, 0
        %vm515 = vcmask 1043456
        %vm516 = vcmask 1044480
        %v517 = vsel %vm515, 4294967295, 65535
        %v518 = vsel %vm516, %v517, 0
        %v520 = vand.u32 %v487, %v518
        %v523 = vand.u32 %v488, %v518
        %v526 = vand.u32 %v489, %v518
        %v529 = vand.u32 %v490, %v518
        %v532 = vand.u32 %v491, %v518
        %v535 = vand.u32 %v492, %v518
        %v538 = vand.u32 %v493, %v518
        %v541 = vand.u32 %v494, %v518
        %v544 = vand.u32 %v495, %v518
        %v547 = vand.u32 %v496, %v518
        %v550 = vand.u32 %v497, %v518
        %v553 = vand.u32 %v498, %v518
        %555 = vmatpush.bf16.msra.mxu0 0
        %556 = vmatpush.bf16.msra.mxu0 0
        %557 = vmatpush.bf16.msra.mxu0 0
        %558 = vmatpush.bf16.msra.mxu0 0
        %559 = vmatpush.bf16.msra.mxu0 0
        %560 = vmatpush.bf16.msra.mxu0 0
        %561 = vmatpush.bf16.msra.mxu0 %v520
        %562 = vmatpush.bf16.msra.mxu0 %v475
        %563 = vmatmul.bf16.gmra.mxu0 %v513
        %v564 = vpop.f32.mrf.mxu0
        %v565 = vadd.f32 %v379, %v564
        %v566 = vpop.f32.mrf.mxu0
        %567 = vdwg.mxu0
        %568 = vmatpush.bf16.msra.mxu0 0
        %569 = vmatpush.bf16.msra.mxu0 0
        %570 = vmatpush.bf16.msra.mxu0 0
        %571 = vmatpush.bf16.msra.mxu0 0
        %572 = vmatpush.bf16.msra.mxu0 0
        %573 = vmatpush.bf16.msra.mxu0 0
        %574 = vmatpush.bf16.msra.mxu0 %v523
        %575 = vmatpush.bf16.msra.mxu0 %v476
        %576 = vmatmul.bf16.gmra.mxu0 %v513
        %v577 = vpop.f32.mrf.mxu0
        %v578 = vadd.f32 %v380, %v577
        %v579 = vpop.f32.mrf.mxu0
        %580 = vdwg.mxu0
        %581 = vmatpush.bf16.msra.mxu0 0
        %582 = vmatpush.bf16.msra.mxu0 0
        %583 = vmatpush.bf16.msra.mxu0 0
        %584 = vmatpush.bf16.msra.mxu0 0
        %585 = vmatpush.bf16.msra.mxu0 0
        %586 = vmatpush.bf16.msra.mxu0 0
        %587 = vmatpush.bf16.msra.mxu0 %v526
        %588 = vmatpush.bf16.msra.mxu0 %v477
        %589 = vmatmul.bf16.gmra.mxu0 %v513
        %v590 = vpop.f32.mrf.mxu0
        %v591 = vadd.f32 %v381, %v590
        %v592 = vpop.f32.mrf.mxu0
        %593 = vdwg.mxu0
        %594 = vmatpush.bf16.msra.mxu0 0
        %595 = vmatpush.bf16.msra.mxu0 0
        %596 = vmatpush.bf16.msra.mxu0 0
        %597 = vmatpush.bf16.msra.mxu0 0
        %598 = vmatpush.bf16.msra.mxu0 0
        %599 = vmatpush.bf16.msra.mxu0 0
        %600 = vmatpush.bf16.msra.mxu0 %v529
        %601 = vmatpush.bf16.msra.mxu0 %v478
        %602 = vmatmul.bf16.gmra.mxu0 %v513
        %v603 = vpop.f32.mrf.mxu0
        %v604 = vadd.f32 %v382, %v603
        %v605 = vpop.f32.mrf.mxu0
        %606 = vdwg.mxu0
        %607 = vmatpush.bf16.msra.mxu0 0
        %608 = vmatpush.bf16.msra.mxu0 0
        %609 = vmatpush.bf16.msra.mxu0 0
        %610 = vmatpush.bf16.msra.mxu0 0
        %611 = vmatpush.bf16.msra.mxu0 0
        %612 = vmatpush.bf16.msra.mxu0 0
        %613 = vmatpush.bf16.msra.mxu0 %v532
        %614 = vmatpush.bf16.msra.mxu0 %v479
        %615 = vmatmul.bf16.gmra.mxu0 %v513
        %v616 = vpop.f32.mrf.mxu0
        %v617 = vadd.f32 %v383, %v616
        %v618 = vpop.f32.mrf.mxu0
        %619 = vdwg.mxu0
        %620 = vmatpush.bf16.msra.mxu0 0
        %621 = vmatpush.bf16.msra.mxu0 0
        %622 = vmatpush.bf16.msra.mxu0 0
        %623 = vmatpush.bf16.msra.mxu0 0
        %624 = vmatpush.bf16.msra.mxu0 0
        %625 = vmatpush.bf16.msra.mxu0 0
        %626 = vmatpush.bf16.msra.mxu0 %v535
        %627 = vmatpush.bf16.msra.mxu0 %v480
        %628 = vmatmul.bf16.gmra.mxu0 %v513
        %v629 = vpop.f32.mrf.mxu0
        %v630 = vadd.f32 %v384, %v629
        %v631 = vpop.f32.mrf.mxu0
        %632 = vdwg.mxu0
        %633 = vmatpush.bf16.msra.mxu0 0
        %634 = vmatpush.bf16.msra.mxu0 0
        %635 = vmatpush.bf16.msra.mxu0 0
        %636 = vmatpush.bf16.msra.mxu0 0
        %637 = vmatpush.bf16.msra.mxu0 0
        %638 = vmatpush.bf16.msra.mxu0 0
        %639 = vmatpush.bf16.msra.mxu0 %v538
        %640 = vmatpush.bf16.msra.mxu0 %v481
        %641 = vmatmul.bf16.gmra.mxu0 %v513
        %v642 = vpop.f32.mrf.mxu0
        %v643 = vadd.f32 %v385, %v642
        %v644 = vpop.f32.mrf.mxu0
        %645 = vdwg.mxu0
        %646 = vmatpush.bf16.msra.mxu0 0
        %647 = vmatpush.bf16.msra.mxu0 0
        %648 = vmatpush.bf16.msra.mxu0 0
        %649 = vmatpush.bf16.msra.mxu0 0
        %650 = vmatpush.bf16.msra.mxu0 0
        %651 = vmatpush.bf16.msra.mxu0 0
        %652 = vmatpush.bf16.msra.mxu0 %v541
        %653 = vmatpush.bf16.msra.mxu0 %v482
        %654 = vmatmul.bf16.gmra.mxu0 %v513
        %v655 = vpop.f32.mrf.mxu0
        %v656 = vadd.f32 %v386, %v655
        %v657 = vpop.f32.mrf.mxu0
        %658 = vdwg.mxu0
        %659 = vmatpush.bf16.msra.mxu0 0
        %660 = vmatpush.bf16.msra.mxu0 0
        %661 = vmatpush.bf16.msra.mxu0 0
        %662 = vmatpush.bf16.msra.mxu0 0
        %663 = vmatpush.bf16.msra.mxu0 0
        %664 = vmatpush.bf16.msra.mxu0 0
        %665 = vmatpush.bf16.msra.mxu0 %v544
        %666 = vmatpush.bf16.msra.mxu0 %v483
        %667 = vmatmul.bf16.gmra.mxu0 %v513
        %v668 = vpop.f32.mrf.mxu0
        %v669 = vadd.f32 %v387, %v668
        %v670 = vpop.f32.mrf.mxu0
        %671 = vdwg.mxu0
        %672 = vmatpush.bf16.msra.mxu0 0
        %673 = vmatpush.bf16.msra.mxu0 0
        %674 = vmatpush.bf16.msra.mxu0 0
        %675 = vmatpush.bf16.msra.mxu0 0
        %676 = vmatpush.bf16.msra.mxu0 0
        %677 = vmatpush.bf16.msra.mxu0 0
        %678 = vmatpush.bf16.msra.mxu0 %v547
        %679 = vmatpush.bf16.msra.mxu0 %v484
        %680 = vmatmul.bf16.gmra.mxu0 %v513
        %v681 = vpop.f32.mrf.mxu0
        %v682 = vadd.f32 %v388, %v681
        %v683 = vpop.f32.mrf.mxu0
        %684 = vdwg.mxu0
        %685 = vmatpush.bf16.msra.mxu0 0
        %686 = vmatpush.bf16.msra.mxu0 0
        %687 = vmatpush.bf16.msra.mxu0 0
        %688 = vmatpush.bf16.msra.mxu0 0
        %689 = vmatpush.bf16.msra.mxu0 0
        %690 = vmatpush.bf16.msra.mxu0 0
        %691 = vmatpush.bf16.msra.mxu0 %v550
        %692 = vmatpush.bf16.msra.mxu0 %v485
        %693 = vmatmul.bf16.gmra.mxu0 %v513
        %v694 = vpop.f32.mrf.mxu0
        %v695 = vadd.f32 %v389, %v694
        %v696 = vpop.f32.mrf.mxu0
        %697 = vdwg.mxu0
        %698 = vmatpush.bf16.msra.mxu0 0
        %699 = vmatpush.bf16.msra.mxu0 0
        %700 = vmatpush.bf16.msra.mxu0 0
        %701 = vmatpush.bf16.msra.mxu0 0
        %702 = vmatpush.bf16.msra.mxu0 0
        %703 = vmatpush.bf16.msra.mxu0 0
        %704 = vmatpush.bf16.msra.mxu0 %v553
        %705 = vmatpush.bf16.msra.mxu0 %v486
        %706 = vmatmul.bf16.gmra.mxu0 %v513
        %v707 = vpop.f32.mrf.mxu0
        %v708 = vadd.f32 %v390, %v707
        %v709 = vpop.f32.mrf.mxu0
        %710 = vdwg.mxu0
        %v711 = vld [vmem:[%s307] sm:$0xff]
        %v712 = vld [vmem:[#allocation5] sm:$0x3]
        %714 = vset.pattern.permute.xlu0 0
        %715 = vperm.xlu0 %714, %v712
        %v716 = vpop.permute.xlu0 %715
        %v719 = vperm.slane %v711, 0
        %v720 = vperm.slane %v711, 2
        %v721 = vperm.slane %v711, 4
        %v722 = vperm.slane %v711, 6
        %v727 = vperm.slane %v719, 0
        %v728 = vperm.slane %v720, 0
        %v729 = vperm.slane %v721, 0
        %v730 = vperm.slane %v722, 0
        %v731 = vmul.f32 %v716, %v727
        %v732 = vmul.f32 %v716, %v728
        %v733 = vmul.f32 %v716, %v729
        %v734 = vmul.f32 %v716, %v730
        %735 = vset.pattern.permute.xlu0 12
        %736 = vperm.xlu0 %735, %v712
        %v737 = vpop.permute.xlu0 %736
        %v739 = vperm.slane %v711, 1
        %v740 = vperm.slane %v711, 3
        %v741 = vperm.slane %v711, 5
        %v742 = vperm.slane %v711, 7
        %v747 = vperm.slane %v739, 1
        %v748 = vperm.slane %v740, 1
        %v749 = vperm.slane %v741, 1
        %v750 = vperm.slane %v742, 1
        %v751 = vmul.f32 %v737, %v747
        %v752 = vmul.f32 %v737, %v748
        %v753 = vmul.f32 %v737, %v749
        %v754 = vmul.f32 %v737, %v750
        %v755 = vadd.f32 %v731, %v751
        %v756 = vadd.f32 %v732, %v752
        %v757 = vadd.f32 %v733, %v753
        %v758 = vadd.f32 %v734, %v754
        %v759 = vmul.f32 %v755, %v565
        %v760 = vmul.f32 %v756, %v578
        %v761 = vmul.f32 %v757, %v591
        %v762 = vmul.f32 %v758, %v604
        %763 = vset.pattern.permute.xlu0 1
        %764 = vperm.xlu0 %763, %v712
        %v765 = vpop.permute.xlu0 %764
        %v767 = vmul.f32 %v765, %v727
        %v768 = vmul.f32 %v765, %v728
        %v769 = vmul.f32 %v765, %v729
        %v770 = vmul.f32 %v765, %v730
        %771 = vset.pattern.permute.xlu0 13
        %772 = vperm.xlu0 %771, %v712
        %v773 = vpop.permute.xlu0 %772
        %v775 = vmul.f32 %v773, %v747
        %v776 = vmul.f32 %v773, %v748
        %v777 = vmul.f32 %v773, %v749
        %v778 = vmul.f32 %v773, %v750
        %v779 = vadd.f32 %v767, %v775
        %v780 = vadd.f32 %v768, %v776
        %v781 = vadd.f32 %v769, %v777
        %v782 = vadd.f32 %v770, %v778
        %v783 = vmul.f32 %v779, %v617
        %v784 = vmul.f32 %v780, %v630
        %v785 = vmul.f32 %v781, %v643
        %v786 = vmul.f32 %v782, %v656
        %v787 = vadd.f32 %v759, %v783
        %v788 = vadd.f32 %v760, %v784
        %v789 = vadd.f32 %v761, %v785
        %v790 = vadd.f32 %v762, %v786
        %791 = vset.pattern.permute.xlu0 2
        %792 = vperm.xlu0 %791, %v712
        %v793 = vpop.permute.xlu0 %792
        %v795 = vmul.f32 %v793, %v727
        %v796 = vmul.f32 %v793, %v728
        %v797 = vmul.f32 %v793, %v729
        %v798 = vmul.f32 %v793, %v730
        %799 = vset.pattern.permute.xlu0 14
        %800 = vperm.xlu0 %799, %v712
        %v801 = vpop.permute.xlu0 %800
        %v803 = vmul.f32 %v801, %v747
        %v804 = vmul.f32 %v801, %v748
        %v805 = vmul.f32 %v801, %v749
        %v806 = vmul.f32 %v801, %v750
        %v807 = vadd.f32 %v795, %v803
        %v808 = vadd.f32 %v796, %v804
        %v809 = vadd.f32 %v797, %v805
        %v810 = vadd.f32 %v798, %v806
        %v811 = vmul.f32 %v807, %v669
        %v812 = vmul.f32 %v808, %v682
        %v813 = vmul.f32 %v809, %v695
        %v814 = vmul.f32 %v810, %v708
        %v815 = vadd.f32 %v787, %v811
        %v816 = vadd.f32 %v788, %v812
        %v817 = vadd.f32 %v789, %v813
        %v818 = vadd.f32 %v790, %v814
        %819 = vset.pattern.permute.xlu0 3
        %820 = vperm.xlu0 %819, %v712
        %v821 = vpop.permute.xlu0 %820
        %v823 = vmul.f32 %v821, %v727
        %v824 = vmul.f32 %v821, %v728
        %v825 = vmul.f32 %v821, %v729
        %v826 = vmul.f32 %v821, %v730
        %827 = vset.pattern.permute.xlu0 15
        %828 = vperm.xlu0 %827, %v712
        %v829 = vpop.permute.xlu0 %828
        %v831 = vmul.f32 %v829, %v747
        %v832 = vmul.f32 %v829, %v748
        %v833 = vmul.f32 %v829, %v749
        %v834 = vmul.f32 %v829, %v750
        %v835 = vadd.f32 %v823, %v831
        %v836 = vadd.f32 %v824, %v832
        %v837 = vadd.f32 %v825, %v833
        %v838 = vadd.f32 %v826, %v834
        %v839 = vadd.f32 %v815, %v835
        %v840 = vadd.f32 %v816, %v836
        %v841 = vadd.f32 %v817, %v837
        %v842 = vadd.f32 %v818, %v838
        %843 = vset.pattern.permute.xlu0 4
        %844 = vperm.xlu0 %843, %v712
        %v845 = vpop.permute.xlu0 %844
        %v847 = vmul.f32 %v845, %v727
        %v848 = vmul.f32 %v845, %v728
        %v849 = vmul.f32 %v845, %v729
        %v850 = vmul.f32 %v845, %v730
        %851 = vset.pattern.permute.xlu0 16
        %852 = vperm.xlu0 %851, %v712
        %v853 = vpop.permute.xlu0 %852
        %v855 = vmul.f32 %v853, %v747
        %v856 = vmul.f32 %v853, %v748
        %v857 = vmul.f32 %v853, %v749
        %v858 = vmul.f32 %v853, %v750
        %v859 = vadd.f32 %v847, %v855
        %v860 = vadd.f32 %v848, %v856
        %v861 = vadd.f32 %v849, %v857
        %v862 = vadd.f32 %v850, %v858
        %v863 = vmul.f32 %v859, %v565
        %v864 = vmul.f32 %v860, %v578
        %v865 = vmul.f32 %v861, %v591
        %v866 = vmul.f32 %v862, %v604
        %867 = vset.pattern.permute.xlu0 5
        %868 = vperm.xlu0 %867, %v712
        %v869 = vpop.permute.xlu0 %868
        %v871 = vmul.f32 %v869, %v727
        %v872 = vmul.f32 %v869, %v728
        %v873 = vmul.f32 %v869, %v729
        %v874 = vmul.f32 %v869, %v730
        %875 = vset.pattern.permute.xlu0 17
        %876 = vperm.xlu0 %875, %v712
        %v877 = vpop.permute.xlu0 %876
        %v879 = vmul.f32 %v877, %v747
        %v880 = vmul.f32 %v877, %v748
        %v881 = vmul.f32 %v877, %v749
        %v882 = vmul.f32 %v877, %v750
        %v883 = vadd.f32 %v871, %v879
        %v884 = vadd.f32 %v872, %v880
        %v885 = vadd.f32 %v873, %v881
        %v886 = vadd.f32 %v874, %v882
        %v887 = vmul.f32 %v883, %v617
        %v888 = vmul.f32 %v884, %v630
        %v889 = vmul.f32 %v885, %v643
        %v890 = vmul.f32 %v886, %v656
        %v891 = vadd.f32 %v863, %v887
        %v892 = vadd.f32 %v864, %v888
        %v893 = vadd.f32 %v865, %v889
        %v894 = vadd.f32 %v866, %v890
        %895 = vset.pattern.permute.xlu0 6
        %896 = vperm.xlu0 %895, %v712
        %v897 = vpop.permute.xlu0 %896
        %v899 = vmul.f32 %v897, %v727
        %v900 = vmul.f32 %v897, %v728
        %v901 = vmul.f32 %v897, %v729
        %v902 = vmul.f32 %v897, %v730
        %903 = vset.pattern.permute.xlu0 18
        %904 = vperm.xlu0 %903, %v712
        %v905 = vpop.permute.xlu0 %904
        %v907 = vmul.f32 %v905, %v747
        %v908 = vmul.f32 %v905, %v748
        %v909 = vmul.f32 %v905, %v749
        %v910 = vmul.f32 %v905, %v750
        %v911 = vadd.f32 %v899, %v907
        %v912 = vadd.f32 %v900, %v908
        %v913 = vadd.f32 %v901, %v909
        %v914 = vadd.f32 %v902, %v910
        %v915 = vmul.f32 %v911, %v669
        %v916 = vmul.f32 %v912, %v682
        %v917 = vmul.f32 %v913, %v695
        %v918 = vmul.f32 %v914, %v708
        %v919 = vadd.f32 %v891, %v915
        %v920 = vadd.f32 %v892, %v916
        %v921 = vadd.f32 %v893, %v917
        %v922 = vadd.f32 %v894, %v918
        %923 = vset.pattern.permute.xlu0 7
        %924 = vperm.xlu0 %923, %v712
        %v925 = vpop.permute.xlu0 %924
        %v927 = vmul.f32 %v925, %v727
        %v928 = vmul.f32 %v925, %v728
        %v929 = vmul.f32 %v925, %v729
        %v930 = vmul.f32 %v925, %v730
        %931 = vset.pattern.permute.xlu0 19
        %932 = vperm.xlu0 %931, %v712
        %v933 = vpop.permute.xlu0 %932
        %v935 = vmul.f32 %v933, %v747
        %v936 = vmul.f32 %v933, %v748
        %v937 = vmul.f32 %v933, %v749
        %v938 = vmul.f32 %v933, %v750
        %v939 = vadd.f32 %v927, %v935
        %v940 = vadd.f32 %v928, %v936
        %v941 = vadd.f32 %v929, %v937
        %v942 = vadd.f32 %v930, %v938
        %v943 = vadd.f32 %v919, %v939
        %v944 = vadd.f32 %v920, %v940
        %v945 = vadd.f32 %v921, %v941
        %v946 = vadd.f32 %v922, %v942
        %947 = vset.pattern.permute.xlu0 8
        %948 = vperm.xlu0 %947, %v712
        %v949 = vpop.permute.xlu0 %948
        %v951 = vmul.f32 %v949, %v727
        %v952 = vmul.f32 %v949, %v728
        %v953 = vmul.f32 %v949, %v729
        %v954 = vmul.f32 %v949, %v730
        %955 = vset.pattern.permute.xlu0 20
        %956 = vperm.xlu0 %955, %v712
        %v957 = vpop.permute.xlu0 %956
        %v959 = vmul.f32 %v957, %v747
        %v960 = vmul.f32 %v957, %v748
        %v961 = vmul.f32 %v957, %v749
        %v962 = vmul.f32 %v957, %v750
        %v963 = vadd.f32 %v951, %v959
        %v964 = vadd.f32 %v952, %v960
        %v965 = vadd.f32 %v953, %v961
        %v966 = vadd.f32 %v954, %v962
        %v967 = vmul.f32 %v963, %v565
        %v968 = vmul.f32 %v964, %v578
        %v969 = vmul.f32 %v965, %v591
        %v970 = vmul.f32 %v966, %v604
        %971 = vset.pattern.permute.xlu0 9
        %972 = vperm.xlu0 %971, %v712
        %v973 = vpop.permute.xlu0 %972
        %v975 = vmul.f32 %v973, %v727
        %v976 = vmul.f32 %v973, %v728
        %v977 = vmul.f32 %v973, %v729
        %v978 = vmul.f32 %v973, %v730
        %979 = vset.pattern.permute.xlu0 21
        %980 = vperm.xlu0 %979, %v712
        %v981 = vpop.permute.xlu0 %980
        %v983 = vmul.f32 %v981, %v747
        %v984 = vmul.f32 %v981, %v748
        %v985 = vmul.f32 %v981, %v749
        %v986 = vmul.f32 %v981, %v750
        %v987 = vadd.f32 %v975, %v983
        %v988 = vadd.f32 %v976, %v984
        %v989 = vadd.f32 %v977, %v985
        %v990 = vadd.f32 %v978, %v986
        %v991 = vmul.f32 %v987, %v617
        %v992 = vmul.f32 %v988, %v630
        %v993 = vmul.f32 %v989, %v643
        %v994 = vmul.f32 %v990, %v656
        %v995 = vadd.f32 %v967, %v991
        %v996 = vadd.f32 %v968, %v992
        %v997 = vadd.f32 %v969, %v993
        %v998 = vadd.f32 %v970, %v994
        %999 = vset.pattern.permute.xlu0 10
        %1000 = vperm.xlu0 %999, %v712
        %v1001 = vpop.permute.xlu0 %1000
        %v1003 = vmul.f32 %v1001, %v727
        %v1004 = vmul.f32 %v1001, %v728
        %v1005 = vmul.f32 %v1001, %v729
        %v1006 = vmul.f32 %v1001, %v730
        %1007 = vset.pattern.permute.xlu0 22
        %1008 = vperm.xlu0 %1007, %v712
        %v1009 = vpop.permute.xlu0 %1008
        %v1011 = vmul.f32 %v1009, %v747
        %v1012 = vmul.f32 %v1009, %v748
        %v1013 = vmul.f32 %v1009, %v749
        %v1014 = vmul.f32 %v1009, %v750
        %v1015 = vadd.f32 %v1003, %v1011
        %v1016 = vadd.f32 %v1004, %v1012
        %v1017 = vadd.f32 %v1005, %v1013
        %v1018 = vadd.f32 %v1006, %v1014
        %v1019 = vmul.f32 %v1015, %v669
        %v1020 = vmul.f32 %v1016, %v682
        %v1021 = vmul.f32 %v1017, %v695
        %v1022 = vmul.f32 %v1018, %v708
        %v1023 = vadd.f32 %v995, %v1019
        %v1024 = vadd.f32 %v996, %v1020
        %v1025 = vadd.f32 %v997, %v1021
        %v1026 = vadd.f32 %v998, %v1022
        %1027 = vset.pattern.permute.xlu0 11
        %1028 = vperm.xlu0 %1027, %v712
        %v1029 = vpop.permute.xlu0 %1028
        %v1031 = vmul.f32 %v1029, %v727
        %v1032 = vmul.f32 %v1029, %v728
        %v1033 = vmul.f32 %v1029, %v729
        %v1034 = vmul.f32 %v1029, %v730
        %1035 = vset.pattern.permute.xlu0 23
        %1036 = vperm.xlu0 %1035, %v712
        %v1037 = vpop.permute.xlu0 %1036
        %v1039 = vmul.f32 %v1037, %v747
        %v1040 = vmul.f32 %v1037, %v748
        %v1041 = vmul.f32 %v1037, %v749
        %v1042 = vmul.f32 %v1037, %v750
        %v1043 = vadd.f32 %v1031, %v1039
        %v1044 = vadd.f32 %v1032, %v1040
        %v1045 = vadd.f32 %v1033, %v1041
        %v1046 = vadd.f32 %v1034, %v1042
        %v1047 = vadd.f32 %v1023, %v1043
        %v1048 = vadd.f32 %v1024, %v1044
        %v1049 = vadd.f32 %v1025, %v1045
        %v1050 = vadd.f32 %v1026, %v1046
        %v1055 = vrot.slane %v943, 6
        %v1056 = vrot.slane %v944, 6
        %v1057 = vrot.slane %v945, 6
        %v1058 = vrot.slane %v946, 6
        %v1067 = vrot.slane %v1047, 4
        %v1068 = vrot.slane %v1048, 4
        %v1069 = vrot.slane %v1049, 4
        %v1070 = vrot.slane %v1050, 4
        %vm1075 = vcmask 1041408
        %v1076 = vsel %vm1075, %v839, %v1055
        %v1077 = vsel %vm1075, %v840, %v1056
        %v1078 = vsel %vm1075, %v841, %v1057
        %v1079 = vsel %vm1075, %v842, %v1058
        %v1080 = vsel %vm515, %v1076, %v1067
        %v1081 = vsel %vm515, %v1077, %v1068
        %v1082 = vsel %vm515, %v1078, %v1069
        %v1083 = vsel %vm515, %v1079, %v1070
        %1084 = vst [vmem:[%s344] sm:$0x3f] %v1080
        %1085 = vst [vmem:[%s344 + $0x8] sm:$0x3f] %v1081
        %1086 = vst [vmem:[%s344 + $0x10] sm:$0x3f] %v1082
        %1087 = vst [vmem:[%s344 + $0x18] sm:$0x3f] %v1083
        %s1088 = sand.u32 %s149, 1
        %s1089 = scalar_lea.sflag [#allocation4], %s1088
        %s1090 = sand.u32 %s149, 1
        %s1091 = smul.addr %s1090, 32
        %s1092 = scalar_lea.vmem [#allocation10], %s1091
        // Predicated region
        $region61: #{tpu_custom_call.1} parent=39 // pred_check
          %p1093 = pneg %p159
        $region62: #{tpu_custom_call.1} parent=39 // pred_check_branch
          %1095 = sbr.rel (%p1093) target = $region64
        $region63: #{tpu_custom_call.1} parent=39 // pred_region
          %s1096 = smul.u32 4, %s21
          %1098 = vsyncadd %s1089, 0
          %s1099 = smul.addr %s1096, 8
          %s1100 = scalar_lea.hbm %s5, %s1099
          %s1102 = sshll.u32 %s1092, 4
          %s1103 = int_to_ptr.vmem [resolvable:$true] %s1102
          %s1104 = sshll.u32 %s1100, 4
          %s1105 = int_to_ptr.hbm [resolvable:$true] %s1104
          %1107 = dma.vmem_to_hbm [thread:$0]  %s1103, 512, %s1105, %s1089
        $region64: #{tpu_custom_call.1} parent=39 // pred_fallthru
          _
      $region40: #{tpu_custom_call.1} parent=5 // pred_fallthru
        _
      %p1108 = scmp.le.s32.totalorder 2, %s16
      // Predicated region
      $region65: #{tpu_custom_call.1} parent=5 // pred_check
        %p1109 = pneg %p1108
      $region66: #{tpu_custom_call.1} parent=5 // pred_check_branch
        %1111 = sbr.rel (%p1109) target = $region68
      $region67: #{tpu_custom_call.1} parent=5 // pred_region
        %s1112 = ssub.s32 %s16, 2
        // Predicated region
        $region69: #{tpu_custom_call.1} parent=67 // pred_check
          %p1113 = pneg %p165
        $region70: #{tpu_custom_call.1} parent=67 // pred_check_branch
          %1115 = sbr.rel (%p1113) target = $region72
        $region71: #{tpu_custom_call.1} parent=67 // pred_region
          %s1116 = sand.u32 %s150, 1
          %s1117 = scalar_lea.sflag [#allocation4], %s1116
          %s1118 = sand.u32 %s150, 1
          %s1119 = smul.addr %s1118, 32
          %s1120 = scalar_lea.vmem [#allocation10], %s1119
          %1122 = dma.done %s1117, 512
        $region72: #{tpu_custom_call.1} parent=67 // pred_fallthru
          _
      $region68: #{tpu_custom_call.1} parent=5 // pred_fallthru
        _
    $region6: #{tpu_custom_call.1} parent=1 // loop_footer
      %s20 = sadd.s32 1, %s16
    $region7: #{tpu_custom_call.1} parent=1 // loop_footer_branch
      %15 = sbr.rel target = $region3
    $region8: #{tpu_custom_call.1} parent=1 // loop_exit
      _
    %1123 = vsyncpa [#allocation3], 1
    %s1124 = scalar_lea.sflag [#allocation3], 1
    %1125 = vsyncpa %s1124, 1
    %1126 = vsyncpa [#allocation6], 1
    %1127 = vsyncpa [#allocation4], 1
    %s1128 = scalar_lea.sflag [#allocation4], 1
    %1129 = vsyncpa %s1128, 1

</llo_original>
